<compile_context>
chip_gen: v6e
topology: v6e:2x2x1
jax: 0.10.0
libtpu: 0.0.40
codegen_flags: <defaults>
</compile_context>

<pallas_src>
import functools
import math

import jax
import jax.numpy as jnp
from jax.experimental import pallas as pl
from jax.experimental.pallas import tpu as pltpu

_INV_SQRT2 = 1.0 / math.sqrt(2.0)
_SQRT_2_OVER_PI = math.sqrt(2.0 / math.pi)
_LN_EPS = 1e-5
_LANE = 128
_SINGLE_STEP_B_TILE = 8 * 1024    # up to here: one grid step is cheapest
_MAX_B_TILE = 32 * 1024           # safe on v7x (64 MiB/TC VMEM) with 48 MiB scoped limit


def _round_up(x, m):
    return -(-x // m) * m


def _auto_b_tile(batch):
    bt = _round_up(batch, _LANE)
    if bt <= _SINGLE_STEP_B_TILE:
        return bt                                   # whole batch in a single step
    # >= 2 grid steps so the "parallel" batch axis can shard across both v7x cores.
    bt = _round_up(-(-batch // 2), _LANE)
    return min(bt, _MAX_B_TILE)


def _gelu(v, approximate):
    if approximate:
        # tanh form: transcendental goes to the EUP slot instead of ~30 VALU ops/elem.
        return 0.5 * v * (1.0 + jnp.tanh(_SQRT_2_OVER_PI * (v + 0.044715 * v * v * v)))
    # PyTorch F.gelu default (approximate='none'): 0.5*x*(1+erf(x/sqrt(2)))
    return 0.5 * v * (1.0 + jax.lax.erf(v * _INV_SQRT2))


def _residual_block_kernel(x_ref, w1_ref, b1_ref, w2_ref, b2_ref,
                           gamma_ref, beta_ref, o_ref, *, approximate_gelu):
    x = x_ref[...].astype(jnp.float32)            # [D, Bt]  (batch on lanes)
    w1 = w1_ref[...].astype(jnp.float32)          # [L, D]
    w2 = w2_ref[...].astype(jnp.float32)          # [D, L]

    # dense1 + gelu : [L, D] @ [D, Bt] -> [L, Bt]
    h = jnp.dot(w1, x, preferred_element_type=jnp.float32)
    h = h + b1_ref[...].astype(jnp.float32)       # [L, 1] broadcast over lanes
    h = _gelu(h, approximate_gelu)

    # TODO(synk): Dropout(0.1) is identity in eval mode; a training-parity kernel
    # would mask with pltpu.prng_seed / pltpu.prng_random_bits.

    # dense2 + gelu : [D, L] @ [L, Bt] -> [D, Bt]
    y = jnp.dot(w2, h, preferred_element_type=jnp.float32)
    y = y + b2_ref[...].astype(jnp.float32)       # [D, 1]
    y = _gelu(y, approximate_gelu)

    # residual + LayerNorm over feature axis (axis 0, 8 sublanes, biased variance).
    # Per-lane statistics => garbage lanes in a ragged edge block never leak into
    # valid columns; out-of-bounds lanes are masked on writeback by Pallas.
    z = y + x
    mean = jnp.mean(z, axis=0, keepdims=True)                  # [1, Bt]
    var = jnp.mean((z - mean) ** 2, axis=0, keepdims=True)     # [1, Bt]
    z_norm = (z - mean) * jax.lax.rsqrt(var + _LN_EPS)
    out = (z_norm * gamma_ref[...].astype(jnp.float32)
           + beta_ref[...].astype(jnp.float32))
    o_ref[...] = out.astype(o_ref.dtype)          # lane-dense [8, Bt] store


def _residual_block_lane_major_impl(xt, w1, b1, w2, b2, gamma, beta, *,
                                    b_tile=None, approximate_gelu=False):
    """xt: [n_input, B] (features on sublanes, batch on lanes). Returns [n_input, B].

    Use this entry point when stacking blocks (ResNet style) so the [8, B] layout is
    kept across blocks and the x.T / out.T HBM round trips are paid only once at
    model entry/exit."""
    D, B = xt.shape
    L = w1.shape[0]
    assert D == 8, "LayerNorm(8) in the PyTorch module forces n_input == 8"
    if b_tile is None:
        b_tile = _auto_b_tile(B)
    assert b_tile % _LANE == 0

    b1_2d = b1.reshape(L, 1)
    b2_2d = b2.reshape(D, 1)
    gamma_2d = gamma.reshape(D, 1)
    beta_2d = beta.reshape(D, 1)

    resident = lambda i: (0, 0)                   # weights stay in VMEM across steps
    batched = lambda i: (0, i)

    itemsize = jnp.dtype(xt.dtype).itemsize
    cost = pl.CostEstimate(
        flops=4 * B * D * L,                      # two matmuls (mul+add each)
        transcendentals=B * (D + L),              # one erf/tanh per GELU element
        bytes_accessed=(2 * B * D) * itemsize + (2 * D * L + L + 3 * D) * 4,
    )

    kernel = functools.partial(_residual_block_kernel,
                               approximate_gelu=approximate_gelu)

    return pl.pallas_call(
        kernel,
        out_shape=jax.ShapeDtypeStruct((D, B), xt.dtype),
        grid=(pl.cdiv(B, b_tile),),               # ragged tail block is masked on write
        in_specs=[
            pl.BlockSpec((D, b_tile), batched),   # x     [8, Bt]
            pl.BlockSpec((L, D), resident),       # w1    [32, 8]
            pl.BlockSpec((L, 1), resident),       # b1
            pl.BlockSpec((D, L), resident),       # w2    [8, 32]
            pl.BlockSpec((D, 1), resident),       # b2
            pl.BlockSpec((D, 1), resident),       # gamma
            pl.BlockSpec((D, 1), resident),       # beta
        ],
        out_specs=pl.BlockSpec((D, b_tile), batched),
        compiler_params=pltpu.CompilerParams(
            dimension_semantics=("parallel",),    # megacore shard on v7x
            vmem_limit_bytes=48 * 1024 * 1024,    # <= v7x 64 MiB/TC; ample on v5e/v6e
        ),
        cost_estimate=cost,
    )(xt, w1, b1_2d, w2, b2_2d, gamma_2d, beta_2d)


residual_block_lane_major = jax.jit(
    _residual_block_lane_major_impl,
    static_argnames=("b_tile", "approximate_gelu"))


@functools.partial(jax.jit, static_argnames=("b_tile", "approximate_gelu"))
def residual_block(x, w1, b1, w2, b2, gamma, beta, *,
                   b_tile=None, approximate_gelu=False):
    """PyTorch-layout entry point. x: [B, n_input]; weights in nn.Linear layout:
       w1: [n_latent, n_input], b1: [n_latent], w2: [n_input, n_latent],
       b2/gamma/beta: [n_input]. Returns [B, n_input]."""
    out_t = _residual_block_lane_major_impl(
        x.T, w1, b1, w2, b2, gamma, beta,
        b_tile=b_tile, approximate_gelu=approximate_gelu)
    return out_t.T


if __name__ == "__main__":
    n_input = 8        # must be 8 to match LayerNorm(8) in the PyTorch module
    n_latent = 32
    batch = 300        # deliberately not a multiple of 128 to exercise the ragged tail

    key = jax.random.PRNGKey(0)
    kx, k1, k2, k3, k4 = jax.random.split(key, 5)

    x = jax.random.normal(kx, (batch, n_input), dtype=jnp.float32)

    # PyTorch Linear stores W as [out_features, in_features]; pass as-is.
    w1 = jax.random.normal(k1, (n_latent, n_input), dtype=jnp.float32) * 0.1
    b1 = jax.random.normal(k2, (n_latent,), dtype=jnp.float32) * 0.1
    w2 = jax.random.normal(k3, (n_input, n_latent), dtype=jnp.float32) * 0.1
    b2 = jax.random.normal(k4, (n_input,), dtype=jnp.float32) * 0.1
    gamma = jnp.ones((n_input,), dtype=jnp.float32)   # LayerNorm weight init
    beta = jnp.zeros((n_input,), dtype=jnp.float32)   # LayerNorm bias init

    # Pure-JAX reference (eval-mode dropout, exact gelu, biased LN variance)
    def ref(xv):
        h = xv @ w1.T + b1
        h = 0.5 * h * (1.0 + jax.lax.erf(h * _INV_SQRT2))
        y = h @ w2.T + b2
        y = 0.5 * y * (1.0 + jax.lax.erf(y * _INV_SQRT2))
        z = y + xv
        m = jnp.mean(z, axis=-1, keepdims=True)
        v = jnp.mean((z - m) ** 2, axis=-1, keepdims=True)
        return (z - m) * jax.lax.rsqrt(v + _LN_EPS) * gamma + beta

    expected = ref(x)

    # 1) Auto tile: single step, ragged block (Bt=384 > B=300), masked writeback.
    out = residual_block(x, w1, b1, w2, b2, gamma, beta)
    jax.block_until_ready(out)
    assert jnp.allclose(out, expected, atol=1e-5, rtol=1e-5)

    # 2) Forced small tile: multi-step grid with ragged tail + VMEM-resident weights.
    out_small = residual_block(x, w1, b1, w2, b2, gamma, beta, b_tile=128)
    jax.block_until_ready(out_small)
    assert jnp.allclose(out_small, expected, atol=1e-5, rtol=1e-5)

    # 3) Lane-major path (no wrapper transposes; intended for stacked blocks).
    out_lm = residual_block_lane_major(x.T, w1, b1, w2, b2, gamma, beta)
    jax.block_until_ready(out_lm)
    assert jnp.allclose(out_lm.T, expected, atol=1e-5, rtol=1e-5)

    print("KERNEL_OK")
</pallas_src>

<mosaic_0001>
module attributes {stable_mosaic.version = 11 : i64} {
  func.func @_residual_block_kernel(%arg0: i32, %arg1: memref<8x384xf32, #tpu.memory_space<vmem>>, %arg2: memref<32x8xf32, #tpu.memory_space<vmem>>, %arg3: memref<32x1xf32, #tpu.memory_space<vmem>>, %arg4: memref<8x32xf32, #tpu.memory_space<vmem>>, %arg5: memref<8x1xf32, #tpu.memory_space<vmem>>, %arg6: memref<8x1xf32, #tpu.memory_space<vmem>>, %arg7: memref<8x1xf32, #tpu.memory_space<vmem>>, %arg8: memref<8x384xf32, #tpu.memory_space<vmem>>) attributes {dimension_semantics = [#tpu.dimension_semantics<parallel>], iteration_bounds = array<i64: 1>, scalar_prefetch = 0 : i64, scratch_operands = 0 : i64, tpu.core_type = #tpu.core_type<tc>, window_params = [{transform_indices = @transform_0, window_bounds = array<i64: 8, 384>}, {pipeline_mode = #tpu.pipeline_mode<synchronous>, transform_indices = @transform_1, window_bounds = array<i64: 32, 8>}, {pipeline_mode = #tpu.pipeline_mode<synchronous>, transform_indices = @transform_2, window_bounds = array<i64: 32, 1>}, {pipeline_mode = #tpu.pipeline_mode<synchronous>, transform_indices = @transform_3, window_bounds = array<i64: 8, 32>}, {pipeline_mode = #tpu.pipeline_mode<synchronous>, transform_indices = @transform_4, window_bounds = array<i64: 8, 1>}, {pipeline_mode = #tpu.pipeline_mode<synchronous>, transform_indices = @transform_5, window_bounds = array<i64: 8, 1>}, {pipeline_mode = #tpu.pipeline_mode<synchronous>, transform_indices = @transform_6, window_bounds = array<i64: 8, 1>}, {transform_indices = @transform_7, window_bounds = array<i64: 8, 384>}]} {
    %c0 = arith.constant 0 : index
    %c0_0 = arith.constant 0 : index
    %0 = vector.load %arg1[%c0, %c0_0] : memref<8x384xf32, #tpu.memory_space<vmem>>, vector<8x384xf32>
    %c0_1 = arith.constant 0 : index
    %c0_2 = arith.constant 0 : index
    %1 = vector.load %arg2[%c0_1, %c0_2] : memref<32x8xf32, #tpu.memory_space<vmem>>, vector<32x8xf32>
    %c0_3 = arith.constant 0 : index
    %c0_4 = arith.constant 0 : index
    %2 = vector.load %arg4[%c0_3, %c0_4] : memref<8x32xf32, #tpu.memory_space<vmem>>, vector<8x32xf32>
    %cst = arith.constant dense<0.000000e+00> : vector<32x384xf32>
    %3 = tpu.matmul %1, %0, %cst {dimension_numbers = #tpu.dot_dimension_numbers<[1], [0], [0], [1], [0, 0, 1, 1], [], []>} : vector<32x8xf32>, vector<8x384xf32>, vector<32x384xf32> -> vector<32x384xf32>
    %c0_5 = arith.constant 0 : index
    %c0_6 = arith.constant 0 : index
    %4 = vector.load %arg3[%c0_5, %c0_6] : memref<32x1xf32, #tpu.memory_space<vmem>>, vector<32x1xf32>
    %5 = vector.broadcast %4 : vector<32x1xf32> to vector<32x384xf32>
    %6 = arith.addf %3, %5 : vector<32x384xf32>
    %cst_7 = arith.constant 5.000000e-01 : f32
    %7 = vector.broadcast %cst_7 : f32 to vector<32x384xf32>
    %8 = arith.mulf %7, %6 : vector<32x384xf32>
    %cst_8 = arith.constant 0.707106769 : f32
    %9 = vector.broadcast %cst_8 : f32 to vector<32x384xf32>
    %10 = arith.mulf %6, %9 : vector<32x384xf32>
    %11 = math.erf %10 : vector<32x384xf32>
    %cst_9 = arith.constant 1.000000e+00 : f32
    %12 = vector.broadcast %cst_9 : f32 to vector<32x384xf32>
    %13 = arith.addf %12, %11 : vector<32x384xf32>
    %14 = arith.mulf %8, %13 : vector<32x384xf32>
    %cst_10 = arith.constant dense<0.000000e+00> : vector<8x384xf32>
    %15 = tpu.matmul %2, %14, %cst_10 {dimension_numbers = #tpu.dot_dimension_numbers<[1], [0], [0], [1], [0, 0, 1, 1], [], []>} : vector<8x32xf32>, vector<32x384xf32>, vector<8x384xf32> -> vector<8x384xf32>
    %c0_11 = arith.constant 0 : index
    %c0_12 = arith.constant 0 : index
    %16 = vector.load %arg5[%c0_11, %c0_12] : memref<8x1xf32, #tpu.memory_space<vmem>>, vector<8x1xf32>
    %17 = vector.broadcast %16 : vector<8x1xf32> to vector<8x384xf32>
    %18 = arith.addf %15, %17 : vector<8x384xf32>
    %cst_13 = arith.constant 5.000000e-01 : f32
    %19 = vector.broadcast %cst_13 : f32 to vector<8x384xf32>
    %20 = arith.mulf %19, %18 : vector<8x384xf32>
    %cst_14 = arith.constant 0.707106769 : f32
    %21 = vector.broadcast %cst_14 : f32 to vector<8x384xf32>
    %22 = arith.mulf %18, %21 : vector<8x384xf32>
    %23 = math.erf %22 : vector<8x384xf32>
    %cst_15 = arith.constant 1.000000e+00 : f32
    %24 = vector.broadcast %cst_15 : f32 to vector<8x384xf32>
    %25 = arith.addf %24, %23 : vector<8x384xf32>
    %26 = arith.mulf %20, %25 : vector<8x384xf32>
    %27 = arith.addf %26, %0 : vector<8x384xf32>
    %cst_16 = arith.constant dense<0.000000e+00> : vector<384xf32>
    %28 = vector.multi_reduction <add>, %27, %cst_16 [0] : vector<8x384xf32> to vector<384xf32>
    %29 = vector.shape_cast %28 : vector<384xf32> to vector<1x384xf32>
    %cst_17 = arith.constant 8.000000e+00 : f32
    %30 = vector.broadcast %cst_17 : f32 to vector<1x384xf32>
    %31 = arith.divf %29, %30 : vector<1x384xf32>
    %32 = vector.broadcast %31 : vector<1x384xf32> to vector<8x384xf32>
    %33 = arith.subf %27, %32 : vector<8x384xf32>
    %34 = arith.mulf %33, %33 : vector<8x384xf32>
    %cst_18 = arith.constant dense<0.000000e+00> : vector<384xf32>
    %35 = vector.multi_reduction <add>, %34, %cst_18 [0] : vector<8x384xf32> to vector<384xf32>
    %36 = vector.shape_cast %35 : vector<384xf32> to vector<1x384xf32>
    %cst_19 = arith.constant 8.000000e+00 : f32
    %37 = vector.broadcast %cst_19 : f32 to vector<1x384xf32>
    %38 = arith.divf %36, %37 : vector<1x384xf32>
    %39 = vector.broadcast %31 : vector<1x384xf32> to vector<8x384xf32>
    %40 = arith.subf %27, %39 : vector<8x384xf32>
    %cst_20 = arith.constant 9.99999974E-6 : f32
    %41 = vector.broadcast %cst_20 : f32 to vector<1x384xf32>
    %42 = arith.addf %38, %41 : vector<1x384xf32>
    %43 = math.rsqrt %42 : vector<1x384xf32>
    %44 = vector.broadcast %43 : vector<1x384xf32> to vector<8x384xf32>
    %45 = arith.mulf %40, %44 : vector<8x384xf32>
    %c0_21 = arith.constant 0 : index
    %c0_22 = arith.constant 0 : index
    %46 = vector.load %arg6[%c0_21, %c0_22] : memref<8x1xf32, #tpu.memory_space<vmem>>, vector<8x1xf32>
    %47 = vector.broadcast %46 : vector<8x1xf32> to vector<8x384xf32>
    %48 = arith.mulf %45, %47 : vector<8x384xf32>
    %c0_23 = arith.constant 0 : index
    %c0_24 = arith.constant 0 : index
    %49 = vector.load %arg7[%c0_23, %c0_24] : memref<8x1xf32, #tpu.memory_space<vmem>>, vector<8x1xf32>
    %50 = vector.broadcast %49 : vector<8x1xf32> to vector<8x384xf32>
    %51 = arith.addf %48, %50 : vector<8x384xf32>
    %c0_25 = arith.constant 0 : index
    %c0_26 = arith.constant 0 : index
    %52 = vector.load %arg8[%c0_25, %c0_26] : memref<8x384xf32, #tpu.memory_space<vmem>>, vector<8x384xf32>
    tpu.vector_store %arg8[%c0_25, %c0_26], %51 {strides = array<i32>} : memref<8x384xf32, #tpu.memory_space<vmem>>, vector<8x384xf32>,
    return
  }
  func.func @transform_0(%arg0: i32) -> (i32, i32) {
    %c0_i32 = arith.constant 0 : i32
    %c0_i32_0 = arith.constant 0 : i32
    return %c0_i32, %arg0 : i32, i32
  }
  func.func @transform_1(%arg0: i32) -> (i32, i32) {
    %c0_i32 = arith.constant 0 : i32
    %c0_i32_0 = arith.constant 0 : i32
    %c0_i32_1 = arith.constant 0 : i32
    return %c0_i32, %c0_i32_0 : i32, i32
  }
  func.func @transform_2(%arg0: i32) -> (i32, i32) {
    %c0_i32 = arith.constant 0 : i32
    %c0_i32_0 = arith.constant 0 : i32
    %c0_i32_1 = arith.constant 0 : i32
    return %c0_i32, %c0_i32_0 : i32, i32
  }
  func.func @transform_3(%arg0: i32) -> (i32, i32) {
    %c0_i32 = arith.constant 0 : i32
    %c0_i32_0 = arith.constant 0 : i32
    %c0_i32_1 = arith.constant 0 : i32
    return %c0_i32, %c0_i32_0 : i32, i32
  }
  func.func @transform_4(%arg0: i32) -> (i32, i32) {
    %c0_i32 = arith.constant 0 : i32
    %c0_i32_0 = arith.constant 0 : i32
    %c0_i32_1 = arith.constant 0 : i32
    return %c0_i32, %c0_i32_0 : i32, i32
  }
  func.func @transform_5(%arg0: i32) -> (i32, i32) {
    %c0_i32 = arith.constant 0 : i32
    %c0_i32_0 = arith.constant 0 : i32
    %c0_i32_1 = arith.constant 0 : i32
    return %c0_i32, %c0_i32_0 : i32, i32
  }
  func.func @transform_6(%arg0: i32) -> (i32, i32) {
    %c0_i32 = arith.constant 0 : i32
    %c0_i32_0 = arith.constant 0 : i32
    %c0_i32_1 = arith.constant 0 : i32
    return %c0_i32, %c0_i32_0 : i32, i32
  }
  func.func @transform_7(%arg0: i32) -> (i32, i32) {
    %c0_i32 = arith.constant 0 : i32
    %c0_i32_0 = arith.constant 0 : i32
    return %c0_i32, %arg0 : i32, i32
  }
}

</mosaic_0001>

<llo_original>
// kernel: residual_block.1
$region0: #{residual_block.1}
  #allocation0 [shape = 'u32[]', space=smem, size = 0x4, offset = 0x4, fixed_abs, tag = 'smem constant byte address 0x4 - core index']
  #allocation1 [shape = 'u32[144,128]{1,0:T(1,128)}', space=vmem, size = 0x12000, scoped, tag = 'internal scratch']
  %s0 = inlined_call_operand.vmem [shape: f32[8,300], index: 0, kind: input, shape index: {}]
  %s1 = inlined_call_operand.vmem [shape: f32[32,8], index: 1, kind: input, shape index: {}]
  %s2 = inlined_call_operand.vmem [shape: f32[32,1], index: 2, kind: input, shape index: {}]
  %s3 = inlined_call_operand.vmem [shape: f32[8,32], index: 3, kind: input, shape index: {}]
  %s4 = inlined_call_operand.vmem [shape: f32[8,1], index: 4, kind: input, shape index: {}]
  %s5 = inlined_call_operand.vmem [shape: f32[8,1], index: 5, kind: input, shape index: {}]
  %s6 = inlined_call_operand.vmem [shape: f32[8,1], index: 6, kind: input, shape index: {}]
  %s7 = inlined_call_operand.hbm [shape: f32[8,300], index: 7, kind: output, shape index: {}]
  %s8 = sld [smem:[#allocation0]]
  $region38: #{residual_block.1} parent=0
    _
  %s10 = ssub.s32 1, %s8
  %s11 = scalar_select 0, %s10, %s8
  $region1: #{residual_block.1} parent=0
    #allocation2 [shape = 'u8[12288]{0}', space=vmem, size = 0x3000, scoped, tag = 'output window, operand 0, single buffered']
    #allocation3 [shape = 's32[1]{0}', space=sflag, size = 0x4, scoped, tag = 'scoped memory for residual_block.1']
    %12 = vsyncpa [#allocation3], 0
    // Predicated region
    $region2: #{residual_block.1} parent=1 // pred_check
      _
    $region3: #{residual_block.1} parent=1 // pred_check_branch
      %14 = sbr.rel (0) target = $region5
    $region4: #{residual_block.1} parent=1 // pred_region
      _
    $region5: #{residual_block.1} parent=1 // pred_fallthru
      _
    // Predicated region
    $region6: #{residual_block.1} parent=1 // pred_check
      _
    $region7: #{residual_block.1} parent=1 // pred_check_branch
      %16 = sbr.rel (0) target = $region9
    $region8: #{residual_block.1} parent=1 // pred_region
      _
    $region9: #{residual_block.1} parent=1 // pred_fallthru
      _
    // Predicated region
    $region10: #{residual_block.1} parent=1 // pred_check
      _
    $region11: #{residual_block.1} parent=1 // pred_check_branch
      %18 = sbr.rel (0) target = $region13
    $region12: #{residual_block.1} parent=1 // pred_region
      _
    $region13: #{residual_block.1} parent=1 // pred_fallthru
      _
    // Predicated region
    $region14: #{residual_block.1} parent=1 // pred_check
      _
    $region15: #{residual_block.1} parent=1 // pred_check_branch
      %20 = sbr.rel (0) target = $region17
    $region16: #{residual_block.1} parent=1 // pred_region
      _
    $region17: #{residual_block.1} parent=1 // pred_fallthru
      _
    // Predicated region
    $region18: #{residual_block.1} parent=1 // pred_check
      _
    $region19: #{residual_block.1} parent=1 // pred_check_branch
      %22 = sbr.rel (0) target = $region21
    $region20: #{residual_block.1} parent=1 // pred_region
      _
    $region21: #{residual_block.1} parent=1 // pred_fallthru
      _
    // Predicated region
    $region22: #{residual_block.1} parent=1 // pred_check
      _
    $region23: #{residual_block.1} parent=1 // pred_check_branch
      %24 = sbr.rel (0) target = $region25
    $region24: #{residual_block.1} parent=1 // pred_region
      _
    $region25: #{residual_block.1} parent=1 // pred_fallthru
      _
    // Predicated region
    $region26: #{residual_block.1} parent=1 // pred_check
      _
    $region27: #{residual_block.1} parent=1 // pred_check_branch
      %26 = sbr.rel (0) target = $region29
    $region28: #{residual_block.1} parent=1 // pred_region
      _
    $region29: #{residual_block.1} parent=1 // pred_fallthru
      _
    %v27 = vld [vmem:[%s0] sm:$0xff]
    %v28 = vld [vmem:[%s0 + $0x8] sm:$0xff]
    %v29 = vld [vmem:[%s0 + $0x10] sm:$0xff]
    %v30 = vld [vmem:[%s1] sm:$0xff]
    %v31 = vld [vmem:[%s1 + $0x8] sm:$0xff]
    %v32 = vld [vmem:[%s1 + $0x10] sm:$0xff]
    %v33 = vld [vmem:[%s1 + $0x18] sm:$0xff]
    %v34 = vld [vmem:[%s3] sm:$0xff]
    %v35 = vld [vmem:[%s2] sm:$0xff]
    %v36 = vld [vmem:[%s2 + $0x8] sm:$0xff]
    %v37 = vld [vmem:[%s2 + $0x10] sm:$0xff]
    %v38 = vld [vmem:[%s2 + $0x18] sm:$0xff]
    %40 = vset.pattern.permute.xlu0 0
    %41 = vperm.xlu0 %40, %v35
    %v42 = vpop.permute.xlu0 %41
    %45 = vset.pattern.permute.xlu0 0
    %46 = vperm.xlu0 %45, %v36
    %v47 = vpop.permute.xlu0 %46
    %50 = vset.pattern.permute.xlu0 0
    %51 = vperm.xlu0 %50, %v37
    %v52 = vpop.permute.xlu0 %51
    %55 = vset.pattern.permute.xlu0 0
    %56 = vperm.xlu0 %55, %v38
    %v57 = vpop.permute.xlu0 %56
    %vm59 = vcmask 64512
    %v61 = vsel %vm59, %v30, 0
    %v64 = vsel %vm59, %v31, 0
    %v67 = vsel %vm59, %v32, 0
    %v70 = vsel %vm59, %v33, 0
    %72 = vmatprep.subr.mxu0 0.0
    %73 = vmatpush1.msra.mxu0 0.0
    %74 = vmatprep.subr.mxu0 0.0
    %75 = vmatpush1.msra.mxu0 0.0
    %76 = vmatprep.subr.mxu0 0.0
    %77 = vmatpush1.msra.mxu0 0.0
    %78 = vmatprep.subr.mxu0 0.0
    %79 = vmatpush1.msra.mxu0 0.0
    %80 = vmatprep.subr.mxu0 0.0
    %81 = vmatpush1.msra.mxu0 0.0
    %82 = vmatprep.subr.mxu0 0.0
    %83 = vmatpush1.msra.mxu0 0.0
    %84 = vmatprep.subr.mxu0 0.0
    %85 = vmatpush1.msra.mxu0 0.0
    %86 = vmatprep.subr.mxu0 0.0
    %87 = vmatpush1.msra.mxu0 0.0
    %88 = vmatprep.subr.mxu0 0.0
    %89 = vmatpush1.msra.mxu0 0.0
    %90 = vmatprep.subr.mxu0 0.0
    %91 = vmatpush1.msra.mxu0 0.0
    %92 = vmatprep.subr.mxu0 0.0
    %93 = vmatpush1.msra.mxu0 0.0
    %94 = vmatprep.subr.mxu0 0.0
    %95 = vmatpush1.msra.mxu0 0.0
    %96 = vmatprep.subr.mxu0 0.0
    %97 = vmatpush1.msra.mxu0 0.0
    %98 = vmatprep.subr.mxu0 0.0
    %99 = vmatpush1.msra.mxu0 0.0
    %100 = vmatprep.subr.mxu0 0.0
    %101 = vmatpush1.msra.mxu0 0.0
    %102 = vmatprep.subr.mxu0 %v28
    %103 = vmatpush1.msra.mxu0 %v27
    %104 = vmatprep.subr.mxu0 0.0
    %105 = vmatpush2.msra.mxu0 0.0
    %106 = vmatprep.subr.mxu0 0.0
    %107 = vmatpush2.msra.mxu0 0.0
    %108 = vmatprep.subr.mxu0 0.0
    %109 = vmatpush2.msra.mxu0 0.0
    %110 = vmatprep.subr.mxu0 0.0
    %111 = vmatpush2.msra.mxu0 0.0
    %112 = vmatprep.subr.mxu0 0.0
    %113 = vmatpush2.msra.mxu0 0.0
    %114 = vmatprep.subr.mxu0 0.0
    %115 = vmatpush2.msra.mxu0 0.0
    %116 = vmatprep.subr.mxu0 0.0
    %117 = vmatpush2.msra.mxu0 0.0
    %118 = vmatprep.subr.mxu0 0.0
    %119 = vmatpush2.msra.mxu0 0.0
    %120 = vmatprep.subr.mxu0 0.0
    %121 = vmatpush2.msra.mxu0 0.0
    %122 = vmatprep.subr.mxu0 0.0
    %123 = vmatpush2.msra.mxu0 0.0
    %124 = vmatprep.subr.mxu0 0.0
    %125 = vmatpush2.msra.mxu0 0.0
    %126 = vmatprep.subr.mxu0 0.0
    %127 = vmatpush2.msra.mxu0 0.0
    %128 = vmatprep.subr.mxu0 0.0
    %129 = vmatpush2.msra.mxu0 0.0
    %130 = vmatprep.subr.mxu0 0.0
    %131 = vmatpush2.msra.mxu0 0.0
    %132 = vmatprep.subr.mxu0 0.0
    %133 = vmatpush2.msra.mxu0 0.0
    %134 = vmatprep.subr.mxu0 0.0
    %135 = vmatpush2.msra.mxu0 0.0
    %136 = vmatprep.mubr.f32.mxu0 0.0
    %137 = vmatmul.mubr.f32.gmra.mxu0 %v61
    %v138 = vpop.f32.mrf.mxu0
    %v139 = vadd.f32 %v42, %v138
    %v140 = vpop.f32.mrf.mxu0
    %v141 = vadd.f32 %v42, %v140
    %142 = vmatprep.mubr.f32.mxu0 0.0
    %143 = vmatmul.mubr.f32.gmra.mxu0 %v64
    %v144 = vpop.f32.mrf.mxu0
    %v145 = vadd.f32 %v47, %v144
    %v146 = vpop.f32.mrf.mxu0
    %v147 = vadd.f32 %v47, %v146
    %148 = vmatprep.mubr.f32.mxu0 0.0
    %149 = vmatmul.mubr.f32.gmra.mxu0 %v67
    %v150 = vpop.f32.mrf.mxu0
    %v151 = vadd.f32 %v52, %v150
    %v152 = vpop.f32.mrf.mxu0
    %v153 = vadd.f32 %v52, %v152
    %154 = vmatprep.mubr.f32.mxu0 0.0
    %155 = vmatmul.mubr.f32.gmra.mxu0 %v70
    %v156 = vpop.f32.mrf.mxu0
    %v157 = vadd.f32 %v57, %v156
    %v158 = vpop.f32.mrf.mxu0
    %v159 = vadd.f32 %v57, %v158
    %160 = vdwg.mxu0
    %161 = vmatprep.subr.mxu0 0.0
    %162 = vmatpush1.msra.mxu0 0.0
    %163 = vmatprep.subr.mxu0 0.0
    %164 = vmatpush1.msra.mxu0 0.0
    %165 = vmatprep.subr.mxu0 0.0
    %166 = vmatpush1.msra.mxu0 0.0
    %167 = vmatprep.subr.mxu0 0.0
    %168 = vmatpush1.msra.mxu0 0.0
    %169 = vmatprep.subr.mxu0 0.0
    %170 = vmatpush1.msra.mxu0 0.0
    %171 = vmatprep.subr.mxu0 0.0
    %172 = vmatpush1.msra.mxu0 0.0
    %173 = vmatprep.subr.mxu0 0.0
    %174 = vmatpush1.msra.mxu0 0.0
    %175 = vmatprep.subr.mxu0 0.0
    %176 = vmatpush1.msra.mxu0 0.0
    %177 = vmatprep.subr.mxu0 0.0
    %178 = vmatpush1.msra.mxu0 0.0
    %179 = vmatprep.subr.mxu0 0.0
    %180 = vmatpush1.msra.mxu0 0.0
    %181 = vmatprep.subr.mxu0 0.0
    %182 = vmatpush1.msra.mxu0 0.0
    %183 = vmatprep.subr.mxu0 0.0
    %184 = vmatpush1.msra.mxu0 0.0
    %185 = vmatprep.subr.mxu0 0.0
    %186 = vmatpush1.msra.mxu0 0.0
    %187 = vmatprep.subr.mxu0 0.0
    %188 = vmatpush1.msra.mxu0 0.0
    %189 = vmatprep.subr.mxu0 0.0
    %190 = vmatpush1.msra.mxu0 0.0
    %191 = vmatprep.subr.mxu0 0.0
    %192 = vmatpush1.msra.mxu0 %v29
    %193 = vmatprep.subr.mxu0 0.0
    %194 = vmatpush2.msra.mxu0 0.0
    %195 = vmatprep.subr.mxu0 0.0
    %196 = vmatpush2.msra.mxu0 0.0
    %197 = vmatprep.subr.mxu0 0.0
    %198 = vmatpush2.msra.mxu0 0.0
    %199 = vmatprep.subr.mxu0 0.0
    %200 = vmatpush2.msra.mxu0 0.0
    %201 = vmatprep.subr.mxu0 0.0
    %202 = vmatpush2.msra.mxu0 0.0
    %203 = vmatprep.subr.mxu0 0.0
    %204 = vmatpush2.msra.mxu0 0.0
    %205 = vmatprep.subr.mxu0 0.0
    %206 = vmatpush2.msra.mxu0 0.0
    %207 = vmatprep.subr.mxu0 0.0
    %208 = vmatpush2.msra.mxu0 0.0
    %209 = vmatprep.subr.mxu0 0.0
    %210 = vmatpush2.msra.mxu0 0.0
    %211 = vmatprep.subr.mxu0 0.0
    %212 = vmatpush2.msra.mxu0 0.0
    %213 = vmatprep.subr.mxu0 0.0
    %214 = vmatpush2.msra.mxu0 0.0
    %215 = vmatprep.subr.mxu0 0.0
    %216 = vmatpush2.msra.mxu0 0.0
    %217 = vmatprep.subr.mxu0 0.0
    %218 = vmatpush2.msra.mxu0 0.0
    %219 = vmatprep.subr.mxu0 0.0
    %220 = vmatpush2.msra.mxu0 0.0
    %221 = vmatprep.subr.mxu0 0.0
    %222 = vmatpush2.msra.mxu0 0.0
    %223 = vmatprep.subr.mxu0 0.0
    %224 = vmatpush2.msra.mxu0 0.0
    %225 = vmatprep.mubr.f32.mxu0 0.0
    %226 = vmatmul.mubr.f32.gmra.mxu0 %v61
    %v227 = vpop.f32.mrf.mxu0
    %v228 = vadd.f32 %v42, %v227
    %v229 = vpop.f32.mrf.mxu0
    %230 = vmatprep.mubr.f32.mxu0 0.0
    %231 = vmatmul.mubr.f32.gmra.mxu0 %v64
    %v232 = vpop.f32.mrf.mxu0
    %v233 = vadd.f32 %v47, %v232
    %v234 = vpop.f32.mrf.mxu0
    %235 = vmatprep.mubr.f32.mxu0 0.0
    %236 = vmatmul.mubr.f32.gmra.mxu0 %v67
    %v237 = vpop.f32.mrf.mxu0
    %v238 = vadd.f32 %v52, %v237
    %v239 = vpop.f32.mrf.mxu0
    %240 = vmatprep.mubr.f32.mxu0 0.0
    %241 = vmatmul.mubr.f32.gmra.mxu0 %v70
    %v242 = vpop.f32.mrf.mxu0
    %v243 = vadd.f32 %v57, %v242
    %v244 = vpop.f32.mrf.mxu0
    %245 = vdwg.mxu0
    %v246 = vmul.f32 %v139, 0.5
    %v247 = vmul.f32 %v141, 0.5
    %v248 = vmul.f32 %v228, 0.5
    %v249 = vmul.f32 %v145, 0.5
    %v250 = vmul.f32 %v147, 0.5
    %v251 = vmul.f32 %v233, 0.5
    %v252 = vmul.f32 %v151, 0.5
    %v253 = vmul.f32 %v153, 0.5
    %v254 = vmul.f32 %v238, 0.5
    %v255 = vmul.f32 %v157, 0.5
    %v256 = vmul.f32 %v159, 0.5
    %v257 = vmul.f32 %v243, 0.5
    %v258 = vmul.f32 %v139, 0.70710677
    %v259 = vmul.f32 %v141, 0.70710677
    %v260 = vmul.f32 %v228, 0.70710677
    %v261 = vmul.f32 %v145, 0.70710677
    %v262 = vmul.f32 %v147, 0.70710677
    %v263 = vmul.f32 %v233, 0.70710677
    %v264 = vmul.f32 %v151, 0.70710677
    %v265 = vmul.f32 %v153, 0.70710677
    %v266 = vmul.f32 %v238, 0.70710677
    %v267 = vmul.f32 %v157, 0.70710677
    %v268 = vmul.f32 %v159, 0.70710677
    %v269 = vmul.f32 %v243, 0.70710677
    %v270 = verf.f32.pop %v258
    %v271 = verf.f32.pop %v259
    %v272 = verf.f32.pop %v260
    %v273 = verf.f32.pop %v261
    %v274 = verf.f32.pop %v262
    %v275 = verf.f32.pop %v263
    %v276 = verf.f32.pop %v264
    %v277 = verf.f32.pop %v265
    %v278 = verf.f32.pop %v266
    %v279 = verf.f32.pop %v267
    %v280 = verf.f32.pop %v268
    %v281 = verf.f32.pop %v269
    %v282 = vadd.f32 %v270, 1.0
    %v283 = vadd.f32 %v271, 1.0
    %v284 = vadd.f32 %v272, 1.0
    %v285 = vadd.f32 %v273, 1.0
    %v286 = vadd.f32 %v274, 1.0
    %v287 = vadd.f32 %v275, 1.0
    %v288 = vadd.f32 %v276, 1.0
    %v289 = vadd.f32 %v277, 1.0
    %v290 = vadd.f32 %v278, 1.0
    %v291 = vadd.f32 %v279, 1.0
    %v292 = vadd.f32 %v280, 1.0
    %v293 = vadd.f32 %v281, 1.0
    %v294 = vmul.f32 %v246, %v282
    %v295 = vmul.f32 %v247, %v283
    %v296 = vmul.f32 %v248, %v284
    %v297 = vmul.f32 %v249, %v285
    %v298 = vmul.f32 %v250, %v286
    %v299 = vmul.f32 %v251, %v287
    %v300 = vmul.f32 %v252, %v288
    %v301 = vmul.f32 %v253, %v289
    %v302 = vmul.f32 %v254, %v290
    %v303 = vmul.f32 %v255, %v291
    %v304 = vmul.f32 %v256, %v292
    %v305 = vmul.f32 %v257, %v293
    %v306 = vld [vmem:[%s4] sm:$0xff]
    %308 = vset.pattern.permute.xlu0 0
    %309 = vperm.xlu0 %308, %v306
    %v310 = vpop.permute.xlu0 %309
    %vm312 = vcmask 261120
    %v314 = vsel %vm312, %v34, 0
    %316 = vmatprep.subr.mxu0 0.0
    %317 = vmatpush1.msra.mxu0 0.0
    %318 = vmatprep.subr.mxu0 0.0
    %319 = vmatpush1.msra.mxu0 0.0
    %320 = vmatprep.subr.mxu0 0.0
    %321 = vmatpush1.msra.mxu0 0.0
    %322 = vmatprep.subr.mxu0 0.0
    %323 = vmatpush1.msra.mxu0 0.0
    %324 = vmatprep.subr.mxu0 0.0
    %325 = vmatpush1.msra.mxu0 0.0
    %326 = vmatprep.subr.mxu0 0.0
    %327 = vmatpush1.msra.mxu0 0.0
    %328 = vmatprep.subr.mxu0 0.0
    %329 = vmatpush1.msra.mxu0 0.0
    %330 = vmatprep.subr.mxu0 0.0
    %331 = vmatpush1.msra.mxu0 0.0
    %332 = vmatprep.subr.mxu0 0.0
    %333 = vmatpush1.msra.mxu0 0.0
    %334 = vmatprep.subr.mxu0 0.0
    %335 = vmatpush1.msra.mxu0 0.0
    %336 = vmatprep.subr.mxu0 0.0
    %337 = vmatpush1.msra.mxu0 0.0
    %338 = vmatprep.subr.mxu0 0.0
    %339 = vmatpush1.msra.mxu0 0.0
    %340 = vmatprep.subr.mxu0 %v304
    %341 = vmatpush1.msra.mxu0 %v303
    %342 = vmatprep.subr.mxu0 %v301
    %343 = vmatpush1.msra.mxu0 %v300
    %344 = vmatprep.subr.mxu0 %v298
    %345 = vmatpush1.msra.mxu0 %v297
    %346 = vmatprep.subr.mxu0 %v295
    %347 = vmatpush1.msra.mxu0 %v294
    %348 = vmatprep.subr.mxu0 0.0
    %349 = vmatpush2.msra.mxu0 0.0
    %350 = vmatprep.subr.mxu0 0.0
    %351 = vmatpush2.msra.mxu0 0.0
    %352 = vmatprep.subr.mxu0 0.0
    %353 = vmatpush2.msra.mxu0 0.0
    %354 = vmatprep.subr.mxu0 0.0
    %355 = vmatpush2.msra.mxu0 0.0
    %356 = vmatprep.subr.mxu0 0.0
    %357 = vmatpush2.msra.mxu0 0.0
    %358 = vmatprep.subr.mxu0 0.0
    %359 = vmatpush2.msra.mxu0 0.0
    %360 = vmatprep.subr.mxu0 0.0
    %361 = vmatpush2.msra.mxu0 0.0
    %362 = vmatprep.subr.mxu0 0.0
    %363 = vmatpush2.msra.mxu0 0.0
    %364 = vmatprep.subr.mxu0 0.0
    %365 = vmatpush2.msra.mxu0 0.0
    %366 = vmatprep.subr.mxu0 0.0
    %367 = vmatpush2.msra.mxu0 0.0
    %368 = vmatprep.subr.mxu0 0.0
    %369 = vmatpush2.msra.mxu0 0.0
    %370 = vmatprep.subr.mxu0 0.0
    %371 = vmatpush2.msra.mxu0 0.0
    %372 = vmatprep.subr.mxu0 0.0
    %373 = vmatpush2.msra.mxu0 0.0
    %374 = vmatprep.subr.mxu0 0.0
    %375 = vmatpush2.msra.mxu0 0.0
    %376 = vmatprep.subr.mxu0 0.0
    %377 = vmatpush2.msra.mxu0 0.0
    %378 = vmatprep.subr.mxu0 0.0
    %379 = vmatpush2.msra.mxu0 0.0
    %380 = vmatprep.mubr.f32.mxu0 0.0
    %381 = vmatmul.mubr.f32.gmra.mxu0 %v314
    %v382 = vpop.f32.mrf.mxu0
    %v383 = vadd.f32 %v310, %v382
    %v384 = vpop.f32.mrf.mxu0
    %v385 = vadd.f32 %v310, %v384
    %386 = vdwg.mxu0
    %387 = vmatprep.subr.mxu0 0.0
    %388 = vmatpush1.msra.mxu0 0.0
    %389 = vmatprep.subr.mxu0 0.0
    %390 = vmatpush1.msra.mxu0 0.0
    %391 = vmatprep.subr.mxu0 0.0
    %392 = vmatpush1.msra.mxu0 0.0
    %393 = vmatprep.subr.mxu0 0.0
    %394 = vmatpush1.msra.mxu0 0.0
    %395 = vmatprep.subr.mxu0 0.0
    %396 = vmatpush1.msra.mxu0 0.0
    %397 = vmatprep.subr.mxu0 0.0
    %398 = vmatpush1.msra.mxu0 0.0
    %399 = vmatprep.subr.mxu0 0.0
    %400 = vmatpush1.msra.mxu0 0.0
    %401 = vmatprep.subr.mxu0 0.0
    %402 = vmatpush1.msra.mxu0 0.0
    %403 = vmatprep.subr.mxu0 0.0
    %404 = vmatpush1.msra.mxu0 0.0
    %405 = vmatprep.subr.mxu0 0.0
    %406 = vmatpush1.msra.mxu0 0.0
    %407 = vmatprep.subr.mxu0 0.0
    %408 = vmatpush1.msra.mxu0 0.0
    %409 = vmatprep.subr.mxu0 0.0
    %410 = vmatpush1.msra.mxu0 0.0
    %411 = vmatprep.subr.mxu0 0.0
    %412 = vmatpush1.msra.mxu0 %v305
    %413 = vmatprep.subr.mxu0 0.0
    %414 = vmatpush1.msra.mxu0 %v302
    %415 = vmatprep.subr.mxu0 0.0
    %416 = vmatpush1.msra.mxu0 %v299
    %417 = vmatprep.subr.mxu0 0.0
    %418 = vmatpush1.msra.mxu0 %v296
    %419 = vmatprep.subr.mxu0 0.0
    %420 = vmatpush2.msra.mxu0 0.0
    %421 = vmatprep.subr.mxu0 0.0
    %422 = vmatpush2.msra.mxu0 0.0
    %423 = vmatprep.subr.mxu0 0.0
    %424 = vmatpush2.msra.mxu0 0.0
    %425 = vmatprep.subr.mxu0 0.0
    %426 = vmatpush2.msra.mxu0 0.0
    %427 = vmatprep.subr.mxu0 0.0
    %428 = vmatpush2.msra.mxu0 0.0
    %429 = vmatprep.subr.mxu0 0.0
    %430 = vmatpush2.msra.mxu0 0.0
    %431 = vmatprep.subr.mxu0 0.0
    %432 = vmatpush2.msra.mxu0 0.0
    %433 = vmatprep.subr.mxu0 0.0
    %434 = vmatpush2.msra.mxu0 0.0
    %435 = vmatprep.subr.mxu0 0.0
    %436 = vmatpush2.msra.mxu0 0.0
    %437 = vmatprep.subr.mxu0 0.0
    %438 = vmatpush2.msra.mxu0 0.0
    %439 = vmatprep.subr.mxu0 0.0
    %440 = vmatpush2.msra.mxu0 0.0
    %441 = vmatprep.subr.mxu0 0.0
    %442 = vmatpush2.msra.mxu0 0.0
    %443 = vmatprep.subr.mxu0 0.0
    %444 = vmatpush2.msra.mxu0 0.0
    %445 = vmatprep.subr.mxu0 0.0
    %446 = vmatpush2.msra.mxu0 0.0
    %447 = vmatprep.subr.mxu0 0.0
    %448 = vmatpush2.msra.mxu0 0.0
    %449 = vmatprep.subr.mxu0 0.0
    %450 = vmatpush2.msra.mxu0 0.0
    %451 = vmatprep.mubr.f32.mxu0 0.0
    %452 = vmatmul.mubr.f32.gmra.mxu0 %v314
    %v453 = vpop.f32.mrf.mxu0
    %v454 = vadd.f32 %v310, %v453
    %v455 = vpop.f32.mrf.mxu0
    %456 = vdwg.mxu0
    %v457 = vmul.f32 %v383, 0.5
    %v458 = vmul.f32 %v385, 0.5
    %v459 = vmul.f32 %v454, 0.5
    %v460 = vmul.f32 %v383, 0.70710677
    %v461 = vmul.f32 %v385, 0.70710677
    %v462 = vmul.f32 %v454, 0.70710677
    %v463 = verf.f32.pop %v460
    %v464 = verf.f32.pop %v461
    %v465 = verf.f32.pop %v462
    %v466 = vadd.f32 %v463, 1.0
    %v467 = vadd.f32 %v464, 1.0
    %v468 = vadd.f32 %v465, 1.0
    %v469 = vmul.f32 %v457, %v466
    %v470 = vmul.f32 %v458, %v467
    %v471 = vmul.f32 %v459, %v468
    %v472 = vadd.f32 %v469, %v27
    %v473 = vadd.f32 %v470, %v28
    %v474 = vadd.f32 %v471, %v29
    %v475 = vrot.slane %v472, 4
    %v476 = vadd.f32 %v472, %v475
    %v477 = vrot.slane %v476, 2
    %v478 = vadd.f32 %v476, %v477
    %v479 = vrot.slane %v478, 1
    %v480 = vadd.f32 %v478, %v479
    %v481 = vrot.slane %v473, 4
    %v482 = vadd.f32 %v473, %v481
    %v483 = vrot.slane %v482, 2
    %v484 = vadd.f32 %v482, %v483
    %v485 = vrot.slane %v484, 1
    %v486 = vadd.f32 %v484, %v485
    %v487 = vrot.slane %v474, 4
    %v488 = vadd.f32 %v474, %v487
    %v489 = vrot.slane %v488, 2
    %v490 = vadd.f32 %v488, %v489
    %v491 = vrot.slane %v490, 1
    %v492 = vadd.f32 %v490, %v491
    %v493 = vrcp.pop 8.0
    %v494 = vmul.f32 %v480, %v493
    %v495 = vmul.f32 %v486, %v493
    %v496 = vmul.f32 %v492, %v493
    %v497 = vsub.f32 %v472, %v494
    %v498 = vsub.f32 %v473, %v495
    %v499 = vsub.f32 %v474, %v496
    %v500 = vmul.f32 %v497, %v497
    %v501 = vmul.f32 %v498, %v498
    %v502 = vmul.f32 %v499, %v499
    %v503 = vrot.slane %v500, 4
    %v504 = vadd.f32 %v500, %v503
    %v505 = vrot.slane %v504, 2
    %v506 = vadd.f32 %v504, %v505
    %v507 = vrot.slane %v506, 1
    %v508 = vadd.f32 %v506, %v507
    %v509 = vrot.slane %v501, 4
    %v510 = vadd.f32 %v501, %v509
    %v511 = vrot.slane %v510, 2
    %v512 = vadd.f32 %v510, %v511
    %v513 = vrot.slane %v512, 1
    %v514 = vadd.f32 %v512, %v513
    %v515 = vrot.slane %v502, 4
    %v516 = vadd.f32 %v502, %v515
    %v517 = vrot.slane %v516, 2
    %v518 = vadd.f32 %v516, %v517
    %v519 = vrot.slane %v518, 1
    %v520 = vadd.f32 %v518, %v519
    %v521 = vmul.f32 %v508, %v493
    %v522 = vmul.f32 %v514, %v493
    %v523 = vmul.f32 %v520, %v493
    %v524 = vadd.f32 %v521, 1e-05
    %v525 = vadd.f32 %v522, 1e-05
    %v526 = vadd.f32 %v523, 1e-05
    %v527 = vrsqrt.pop %v524
    %v528 = vrsqrt.pop %v525
    %v529 = vrsqrt.pop %v526
    %v530 = vmul.f32 %v497, %v527
    %v531 = vmul.f32 %v498, %v528
    %v532 = vmul.f32 %v499, %v529
    %v533 = vld [vmem:[%s5] sm:$0xff]
    %535 = vset.pattern.permute.xlu0 0
    %536 = vperm.xlu0 %535, %v533
    %v537 = vpop.permute.xlu0 %536
    %v539 = vmul.f32 %v530, %v537
    %v540 = vmul.f32 %v531, %v537
    %v541 = vmul.f32 %v532, %v537
    %v542 = vld [vmem:[%s6] sm:$0xff]
    %544 = vset.pattern.permute.xlu0 0
    %545 = vperm.xlu0 %544, %v542
    %v546 = vpop.permute.xlu0 %545
    %v548 = vadd.f32 %v539, %v546
    %v549 = vadd.f32 %v540, %v546
    %v550 = vadd.f32 %v541, %v546
    %551 = vst [vmem:[#allocation2] sm:$0xff] %v548
    %552 = vst [vmem:[#allocation2 + $0x8] sm:$0xff] %v549
    %553 = vst [vmem:[#allocation2 + $0x10] sm:$0xff] %v550
    // Predicated region
    $region30: #{residual_block.1} parent=1 // pred_check
      _
    $region31: #{residual_block.1} parent=1 // pred_check_branch
      %555 = sbr.rel (0) target = $region33
    $region32: #{residual_block.1} parent=1 // pred_region
      %s557 = ssub.s32 384, 384
      %558 = vsyncadd [#allocation3], %s557
      %s560 = sshll.u32 [#allocation2], 4
      %s561 = int_to_ptr.vmem [resolvable:$true] %s560
      %563 = dma.vmem_to_hbm [thread:$0]  %s561, 384, %s7, [#allocation3]
    $region33: #{residual_block.1} parent=1 // pred_fallthru
      _
    // Predicated region
    $region34: #{residual_block.1} parent=1 // pred_check
      _
    $region35: #{residual_block.1} parent=1 // pred_check_branch
      %565 = sbr.rel (0) target = $region37
    $region36: #{residual_block.1} parent=1 // pred_region
      %566 = dma.done [#allocation3], 384
    $region37: #{residual_block.1} parent=1 // pred_fallthru
      _
    %567 = vsyncpa [#allocation3], 1

</llo_original>
